<compile_context>
chip_gen: v6e
topology: v6e:2x2x1
jax: 0.10.0
libtpu: 0.0.40
codegen_flags: <defaults>
</compile_context>

<pallas_src>
import jax
import jax.numpy as jnp
from jax.experimental import pallas as pl
from jax.experimental.pallas import tpu as pltpu

LANE = 128       # lane width; hidden/action dims are zero-padded up to this
SUBLANE = 8      # f32 sublane granularity for batch blocks
NEG_MASK = -1e30  # finite "minus infinity": exp(NEG_MASK - m) == 0 exactly in f32


def _round_up(x, m):
    return ((x + m - 1) // m) * m


def _tensorcores_per_chip():
    """Generation-aware TensorCore count (v7x has 2 per chip).

    Falls back to 2: splitting the grid in two costs <1 us on single-TC chips
    (v5e/v6e) but leaving one v7x core idle costs ~2x.
    """
    try:
        info = pltpu.get_tpu_info()
    except Exception:
        return 2
    for attr in ("num_cores", "core_count", "num_tensorcores", "tensorcores_per_chip"):
        v = getattr(info, attr, None)
        if isinstance(v, int) and v > 0:
            return v
    return 2


def actor_kernel(x_ref, w_ref, b_ref, out_ref):
    # x_ref: [bb, 128] f32 (state zero-padded to 128 lanes)
    # w_ref: [4, 128, 128] bf16 (fci, fc1, fc2, fcf, each zero-padded)
    # b_ref: [8, 128] f32 (rows 0..3 = biases; row 3 has NEG_MASK in padded lanes)
    x = x_ref[...].astype(jnp.bfloat16)

    # ---- fci + relu (K = 128 dot; padded rows/cols are zero)
    h = jnp.dot(x, w_ref[0], preferred_element_type=jnp.float32) + b_ref[0:1, :]
    h = jnp.maximum(h, 0.0)

    # ---- fc1 + relu
    h = jnp.dot(h.astype(jnp.bfloat16), w_ref[1],
                preferred_element_type=jnp.float32) + b_ref[1:2, :]
    h = jnp.maximum(h, 0.0)

    # ---- fc2 + relu
    h = jnp.dot(h.astype(jnp.bfloat16), w_ref[2],
                preferred_element_type=jnp.float32) + b_ref[2:3, :]
    h = jnp.maximum(h, 0.0)

    # ---- fcf + softmax(dim=-1).  Padded action lanes carry a -1e30 bias, so
    # exp(logit - m) == 0 there and the 128-lane softmax equals the real
    # action_dim-lane softmax exactly (padded output lanes are exact zeros).
    logits = jnp.dot(h.astype(jnp.bfloat16), w_ref[3],
                     preferred_element_type=jnp.float32) + b_ref[3:4, :]
    m = jnp.max(logits, axis=-1, keepdims=True)
    e = jnp.exp(logits - m)
    denom = jnp.sum(e, axis=-1, keepdims=True)
    out_ref[...] = (e / denom).astype(out_ref.dtype)   # exact normalization


def pack_actor_params(params):
    """Pack the 4 Linear layers into one bf16 weight slab + one f32 bias slab.

    Weights are [in, out] (transpose of torch nn.Linear.weight); each layer is
    zero-padded into a [LANE, LANE] block and cast to bf16 (native MXU operand
    dtype).  Padded action lanes of the final bias get NEG_MASK so the in-kernel
    128-lane softmax matches the real action_dim-lane softmax exactly.
    """
    (wi, bi), (w1, b1), (w2, b2), (wf, bf) = params
    action_dim = wf.shape[1]

    w_slab = jnp.zeros((4, LANE, LANE), jnp.float32)
    for idx, w in enumerate((wi, w1, w2, wf)):
        w_slab = w_slab.at[idx, : w.shape[0], : w.shape[1]].set(w)
    w_slab = w_slab.astype(jnp.bfloat16)

    b_slab = jnp.zeros((8, LANE), jnp.float32)
    for idx, b in enumerate((bi, b1, b2)):
        b_slab = b_slab.at[idx, : b.shape[0]].set(b)
    b_slab = b_slab.at[3, :].set(NEG_MASK)
    b_slab = b_slab.at[3, :action_dim].set(bf)

    return w_slab, b_slab, action_dim


def actor_forward(state, w_slab, b_slab, *, max_block_b=1024):
    """state: [B, state_dim] f32 -> padded action probabilities [B, LANE].

    Lanes >= action_dim are exact zeros, so sampling / argmax / log-prob over
    the 128 lanes is identical to using only the real action lanes.
    """
    B, state_dim = state.shape

    # --- batch block selection ---------------------------------------------
    block_b = min(max_block_b, _round_up(B, SUBLANE))
    n_cores = _tensorcores_per_chip()
    if n_cores > 1 and B >= n_cores * SUBLANE:
        per_core = _round_up(pl.cdiv(B, n_cores), SUBLANE)
        block_b = min(block_b, per_core)        # keep grid >= n_cores (megacore)
    grid_b = pl.cdiv(B, block_b)
    Bp = grid_b * block_b

    # --- lane-dense, batch-padded input slab --------------------------------
    x = jnp.zeros((Bp, LANE), jnp.float32)
    x = x.at[:B, :state_dim].set(state)

    flops = 2 * Bp * LANE * LANE * 4
    bytes_accessed = (Bp * LANE * 4) * 2 + 4 * LANE * LANE * 2 + 8 * LANE * 4

    probs_padded = pl.pallas_call(
        actor_kernel,
        out_shape=jax.ShapeDtypeStruct((Bp, LANE), jnp.float32),
        grid=(grid_b,),
        in_specs=[
            pl.BlockSpec((block_b, LANE), lambda i: (i, 0)),     # batch-tiled input
            pl.BlockSpec((4, LANE, LANE), lambda i: (0, 0, 0)),  # resident weights
            pl.BlockSpec((8, LANE), lambda i: (0, 0)),           # resident biases
        ],
        out_specs=pl.BlockSpec((block_b, LANE), lambda i: (i, 0)),  # lane-dense store
        compiler_params=pltpu.CompilerParams(
            dimension_semantics=("parallel",),   # shards batch across TCs on v7x
            vmem_limit_bytes=32 * 1024 * 1024,
        ),
        cost_estimate=pl.CostEstimate(
            flops=flops, transcendentals=Bp * LANE, bytes_accessed=bytes_accessed),
    )(x, w_slab, b_slab)

    # TODO(synk): fusing the critic head / categorical sampling into this same
    # pallas_call (shared state block + hidden activations) is the next win for
    # a full A2C step; out of scope for Actor.forward.
    return probs_padded if Bp == B else probs_padded[:B]


def actor_reference(state, params):
    """Pure f32 JAX reference (ground truth)."""
    (wi, bi), (w1, b1), (w2, b2), (wf, bf) = params
    h = jax.nn.relu(state @ wi + bi)
    h = jax.nn.relu(h @ w1 + b1)
    h = jax.nn.relu(h @ w2 + b2)
    return jax.nn.softmax(h @ wf + bf, axis=-1)


def actor_reference_bf16(state, params):
    """Reference mirroring the kernel numerics: bf16 MXU operands, f32 accum/epilogue."""
    (wi, bi), (w1, b1), (w2, b2), (wf, bf) = params

    def mm(a, w):
        return jnp.dot(a.astype(jnp.bfloat16), w.astype(jnp.bfloat16),
                       preferred_element_type=jnp.float32)

    h = jax.nn.relu(mm(state, wi) + bi)
    h = jax.nn.relu(mm(h, w1) + b1)
    h = jax.nn.relu(mm(h, w2) + b2)
    return jax.nn.softmax(mm(h, wf) + bf, axis=-1)


def init_linear(key, in_dim, out_dim):
    """Deterministic PyTorch-style nn.Linear init; weight returned as [in, out]."""
    kw, kb = jax.random.split(key)
    bound = 1.0 / jnp.sqrt(jnp.float32(in_dim))
    w = jax.random.uniform(kw, (in_dim, out_dim), jnp.float32, -bound, bound)
    b = jax.random.uniform(kb, (out_dim,), jnp.float32, -bound, bound)
    return w, b


if __name__ == "__main__":
    # Windy gridworld: state = (row, col) -> state_dim=2, 4 actions.
    batch, state_dim, hidden_dim, action_dim = 256, 2, 32, 4

    key = jax.random.PRNGKey(0)
    k_state, k_i, k_1, k_2, k_f = jax.random.split(key, 5)

    params = (
        init_linear(k_i, state_dim, hidden_dim),   # fci
        init_linear(k_1, hidden_dim, hidden_dim),  # fc1
        init_linear(k_2, hidden_dim, hidden_dim),  # fc2
        init_linear(k_f, hidden_dim, action_dim),  # fcf
    )

    state = jax.random.uniform(k_state, (batch, state_dim), jnp.float32, 0.0, 10.0)

    # Pack once (outside the per-step call), reuse every forward.
    w_slab, b_slab, act_dim = pack_actor_params(params)

    probs_padded = actor_forward(state, w_slab, b_slab)
    jax.block_until_ready(probs_padded)

    assert probs_padded.shape == (batch, LANE)
    probs = probs_padded[:, :act_dim]               # verification-only slice

    # rows are exact probability distributions (exact in-kernel normalization)
    assert jnp.allclose(jnp.sum(probs, axis=-1), 1.0, atol=1e-5)
    # padded action lanes are exact zeros (safe to sample/argmax over 128 lanes)
    assert bool(jnp.all(probs_padded[:, act_dim:] == 0.0))
    # tight match vs. a reference with identical numerics (bf16 operands, f32 accum)
    assert jnp.allclose(probs, actor_reference_bf16(state, params), atol=2e-3)
    # loose match vs. the pure-f32 reference (bf16 weight/activation rounding)
    assert jnp.allclose(probs, actor_reference(state, params), atol=5e-2)

    # TODO(synk): temperature_scaled_softmax is not part of Actor.forward; not kernelized.
    print("KERNEL_OK")
</pallas_src>

<mosaic_0001>
module attributes {stable_mosaic.version = 11 : i64} {
  func.func @actor_kernel(%arg0: i32, %arg1: memref<128x128xf32, #tpu.memory_space<vmem>>, %arg2: memref<4x128x128xbf16, #tpu.memory_space<vmem>>, %arg3: memref<8x128xf32, #tpu.memory_space<vmem>>, %arg4: memref<128x128xf32, #tpu.memory_space<vmem>>) attributes {dimension_semantics = [#tpu.dimension_semantics<parallel>], iteration_bounds = array<i64: 2>, scalar_prefetch = 0 : i64, scratch_operands = 0 : i64, tpu.core_type = #tpu.core_type<tc>, window_params = [{transform_indices = @transform_0, window_bounds = array<i64: 128, 128>}, {pipeline_mode = #tpu.pipeline_mode<synchronous>, transform_indices = @transform_1, window_bounds = array<i64: 4, 128, 128>}, {pipeline_mode = #tpu.pipeline_mode<synchronous>, transform_indices = @transform_2, window_bounds = array<i64: 8, 128>}, {transform_indices = @transform_3, window_bounds = array<i64: 128, 128>}]} {
    %c0 = arith.constant 0 : index
    %c0_0 = arith.constant 0 : index
    %0 = vector.load %arg1[%c0, %c0_0] : memref<128x128xf32, #tpu.memory_space<vmem>>, vector<128x128xf32>
    %1 = arith.truncf %0 : vector<128x128xf32> to vector<128x128xbf16>
    %c0_1 = arith.constant 0 : index
    %c0_2 = arith.constant 0 : index
    %c0_3 = arith.constant 0 : index
    %2 = vector.load %arg2[%c0_1, %c0_2, %c0_3] : memref<4x128x128xbf16, #tpu.memory_space<vmem>>, vector<1x128x128xbf16>
    %3 = vector.shape_cast %2 : vector<1x128x128xbf16> to vector<128x128xbf16>
    %cst = arith.constant dense<0.000000e+00> : vector<128x128xf32>
    %4 = tpu.matmul %1, %3, %cst {dimension_numbers = #tpu.dot_dimension_numbers<[1], [0], [0], [1], [0, 0, 1, 1], [], []>} : vector<128x128xbf16>, vector<128x128xbf16>, vector<128x128xf32> -> vector<128x128xf32>
    %c0_4 = arith.constant 0 : index
    %c0_5 = arith.constant 0 : index
    %5 = vector.load %arg3[%c0_4, %c0_5] : memref<8x128xf32, #tpu.memory_space<vmem>>, vector<1x128xf32>
    %6 = vector.broadcast %5 : vector<1x128xf32> to vector<128x128xf32>
    %7 = arith.addf %4, %6 : vector<128x128xf32>
    %cst_6 = arith.constant 0.000000e+00 : f32
    %8 = vector.broadcast %cst_6 : f32 to vector<128x128xf32>
    %9 = arith.maximumf %7, %8 : vector<128x128xf32>
    %10 = arith.truncf %9 : vector<128x128xf32> to vector<128x128xbf16>
    %c1 = arith.constant 1 : index
    %c0_7 = arith.constant 0 : index
    %c0_8 = arith.constant 0 : index
    %11 = vector.load %arg2[%c1, %c0_7, %c0_8] : memref<4x128x128xbf16, #tpu.memory_space<vmem>>, vector<1x128x128xbf16>
    %12 = vector.shape_cast %11 : vector<1x128x128xbf16> to vector<128x128xbf16>
    %cst_9 = arith.constant dense<0.000000e+00> : vector<128x128xf32>
    %13 = tpu.matmul %10, %12, %cst_9 {dimension_numbers = #tpu.dot_dimension_numbers<[1], [0], [0], [1], [0, 0, 1, 1], [], []>} : vector<128x128xbf16>, vector<128x128xbf16>, vector<128x128xf32> -> vector<128x128xf32>
    %c1_10 = arith.constant 1 : index
    %c0_11 = arith.constant 0 : index
    %14 = vector.load %arg3[%c1_10, %c0_11] : memref<8x128xf32, #tpu.memory_space<vmem>>, vector<1x128xf32>
    %15 = vector.broadcast %14 : vector<1x128xf32> to vector<128x128xf32>
    %16 = arith.addf %13, %15 : vector<128x128xf32>
    %cst_12 = arith.constant 0.000000e+00 : f32
    %17 = vector.broadcast %cst_12 : f32 to vector<128x128xf32>
    %18 = arith.maximumf %16, %17 : vector<128x128xf32>
    %19 = arith.truncf %18 : vector<128x128xf32> to vector<128x128xbf16>
    %c2 = arith.constant 2 : index
    %c0_13 = arith.constant 0 : index
    %c0_14 = arith.constant 0 : index
    %20 = vector.load %arg2[%c2, %c0_13, %c0_14] : memref<4x128x128xbf16, #tpu.memory_space<vmem>>, vector<1x128x128xbf16>
    %21 = vector.shape_cast %20 : vector<1x128x128xbf16> to vector<128x128xbf16>
    %cst_15 = arith.constant dense<0.000000e+00> : vector<128x128xf32>
    %22 = tpu.matmul %19, %21, %cst_15 {dimension_numbers = #tpu.dot_dimension_numbers<[1], [0], [0], [1], [0, 0, 1, 1], [], []>} : vector<128x128xbf16>, vector<128x128xbf16>, vector<128x128xf32> -> vector<128x128xf32>
    %c2_16 = arith.constant 2 : index
    %c0_17 = arith.constant 0 : index
    %23 = vector.load %arg3[%c2_16, %c0_17] : memref<8x128xf32, #tpu.memory_space<vmem>>, vector<1x128xf32>
    %24 = vector.broadcast %23 : vector<1x128xf32> to vector<128x128xf32>
    %25 = arith.addf %22, %24 : vector<128x128xf32>
    %cst_18 = arith.constant 0.000000e+00 : f32
    %26 = vector.broadcast %cst_18 : f32 to vector<128x128xf32>
    %27 = arith.maximumf %25, %26 : vector<128x128xf32>
    %28 = arith.truncf %27 : vector<128x128xf32> to vector<128x128xbf16>
    %c3 = arith.constant 3 : index
    %c0_19 = arith.constant 0 : index
    %c0_20 = arith.constant 0 : index
    %29 = vector.load %arg2[%c3, %c0_19, %c0_20] : memref<4x128x128xbf16, #tpu.memory_space<vmem>>, vector<1x128x128xbf16>
    %30 = vector.shape_cast %29 : vector<1x128x128xbf16> to vector<128x128xbf16>
    %cst_21 = arith.constant dense<0.000000e+00> : vector<128x128xf32>
    %31 = tpu.matmul %28, %30, %cst_21 {dimension_numbers = #tpu.dot_dimension_numbers<[1], [0], [0], [1], [0, 0, 1, 1], [], []>} : vector<128x128xbf16>, vector<128x128xbf16>, vector<128x128xf32> -> vector<128x128xf32>
    %c3_22 = arith.constant 3 : index
    %c0_23 = arith.constant 0 : index
    %32 = vector.load %arg3[%c3_22, %c0_23] : memref<8x128xf32, #tpu.memory_space<vmem>>, vector<1x128xf32>
    %33 = vector.broadcast %32 : vector<1x128xf32> to vector<128x128xf32>
    %34 = arith.addf %31, %33 : vector<128x128xf32>
    %cst_24 = arith.constant dense<0xFF800000> : vector<128xf32>
    %35 = vector.multi_reduction <maximumf>, %34, %cst_24 [1] : vector<128x128xf32> to vector<128xf32>
    %36 = vector.shape_cast %35 : vector<128xf32> to vector<128x1xf32>
    %37 = vector.broadcast %36 : vector<128x1xf32> to vector<128x128xf32>
    %38 = arith.subf %34, %37 : vector<128x128xf32>
    %39 = math.exp %38 : vector<128x128xf32>
    %cst_25 = arith.constant dense<0.000000e+00> : vector<128xf32>
    %40 = vector.multi_reduction <add>, %39, %cst_25 [1] : vector<128x128xf32> to vector<128xf32>
    %41 = vector.shape_cast %40 : vector<128xf32> to vector<128x1xf32>
    %42 = vector.broadcast %41 : vector<128x1xf32> to vector<128x128xf32>
    %43 = arith.divf %39, %42 : vector<128x128xf32>
    %c0_26 = arith.constant 0 : index
    %c0_27 = arith.constant 0 : index
    %44 = vector.load %arg4[%c0_26, %c0_27] : memref<128x128xf32, #tpu.memory_space<vmem>>, vector<128x128xf32>
    tpu.vector_store %arg4[%c0_26, %c0_27], %43 {strides = array<i32>} : memref<128x128xf32, #tpu.memory_space<vmem>>, vector<128x128xf32>,
    return
  }
  func.func @transform_0(%arg0: i32) -> (i32, i32) {
    %c0_i32 = arith.constant 0 : i32
    %c0_i32_0 = arith.constant 0 : i32
    return %arg0, %c0_i32 : i32, i32
  }
  func.func @transform_1(%arg0: i32) -> (i32, i32, i32) {
    %c0_i32 = arith.constant 0 : i32
    %c0_i32_0 = arith.constant 0 : i32
    %c0_i32_1 = arith.constant 0 : i32
    %c0_i32_2 = arith.constant 0 : i32
    return %c0_i32, %c0_i32_0, %c0_i32_1 : i32, i32, i32
  }
  func.func @transform_2(%arg0: i32) -> (i32, i32) {
    %c0_i32 = arith.constant 0 : i32
    %c0_i32_0 = arith.constant 0 : i32
    %c0_i32_1 = arith.constant 0 : i32
    return %c0_i32, %c0_i32_0 : i32, i32
  }
  func.func @transform_3(%arg0: i32) -> (i32, i32) {
    %c0_i32 = arith.constant 0 : i32
    %c0_i32_0 = arith.constant 0 : i32
    return %arg0, %c0_i32 : i32, i32
  }
}

</mosaic_0001>

<llo_original>
// kernel: tpu_custom_call.1
$region0: #{tpu_custom_call.1}
  #allocation0 [shape = 'u32[]', space=smem, size = 0x4, offset = 0x4, fixed_abs, tag = 'smem constant byte address 0x4 - core index']
  #allocation1 [shape = 'u32[144,128]{1,0:T(1,128)}', space=vmem, size = 0x12000, scoped, tag = 'internal scratch']
  %s0 = inlined_call_operand.hbm [shape: f32[256,128], index: 0, kind: input, shape index: {}]
  %s1 = inlined_call_operand.hbm [shape: bf16[4,128,128], index: 1, kind: input, shape index: {}]
  %s2 = inlined_call_operand.hbm [shape: f32[8,128], index: 2, kind: input, shape index: {}]
  %s3 = inlined_call_operand.hbm [shape: f32[256,128], index: 3, kind: output, shape index: {}]
  %s4 = sld [smem:[#allocation0]]
  $region57: #{tpu_custom_call.1} parent=0
    _
  %s6 = ssub.s32 1, %s4
  %s7 = scalar_select 0, %s6, %s4
  $region1: #{tpu_custom_call.1} parent=0
    #allocation2 [shape = 'u8[131072]{0}', space=vmem, size = 0x20000, scoped, tag = 'input window, operand 0']
    #allocation3 [shape = 's32[2]{0}', space=sflag, size = 0x8, scoped, tag = 'scoped memory for tpu_custom_call.1']
    #allocation4 [shape = 's32[2]{0}', space=sflag, size = 0x8, scoped, tag = 'scoped memory for tpu_custom_call.1']
    #allocation5 [shape = 'u8[131072]{0}', space=vmem, size = 0x20000, scoped, tag = 'input window, operand 1, single buffered']
    #allocation6 [shape = 's32[1]{0}', space=sflag, size = 0x4, scoped, tag = 'scoped memory for tpu_custom_call.1']
    #allocation7 [shape = 'u8[4096]{0}', space=vmem, size = 0x1000, scoped, tag = 'input window, operand 2, single buffered']
    #allocation8 [shape = 'u8[131072]{0}', space=vmem, size = 0x20000, scoped, tag = 'output window, operand 0']
    %8 = vsyncpa [#allocation3], 0
    %s9 = scalar_lea.sflag [#allocation3], 1
    %10 = vsyncpa %s9, 0
    %11 = vsyncpa [#allocation6], 0
    %12 = vsyncpa [#allocation4], 0
    %s13 = scalar_lea.sflag [#allocation4], 1
    %14 = vsyncpa %s13, 0
    loop: start=0, step=1, limit=4
    $region2: #{tpu_custom_call.1} parent=1 // loop_pre_header
      _
    $region3: #{tpu_custom_call.1} parent=1 // loop_header
      %s16 = sphi 0, %s20
      %p17 = scmp.ge.s32.totalorder %s16, 4
      %s26 = sphi 0, %s28
      %s29 = sphi 0, %s26
      %s30 = sphi 0, %s29
      %s46 = sphi 0, %s30
      %s50 = sphi 0, %s50
      %s52 = sphi 0, %s50
      %s53 = sphi 0, %s52
      %s67 = sphi 0, %s53
      %s71 = sphi 0, %s71
      %s73 = sphi 0, %s71
      %s74 = sphi 0, %s73
      %s88 = sphi 0, %s74
      %s94 = sphi 0, %s96
      %s97 = sphi 0, %s94
      %s98 = sphi 0, %s97
      %s114 = sphi 0, %s98
    $region4: #{tpu_custom_call.1} parent=1 // loop_header_branch
      %19 = sbr.rel (%p17) target = $region8
    $region5: #{tpu_custom_call.1} parent=1 // loop_body
      %s21 = ssub.s32 %s16, 1
      %s22 = ssub.s32 %s16, 2
      %s23 = sadd.s32 %s16, 1
      %s24 = ssub.s32 %s16, %s23
      %p25 = scmp.eq.s32.totalorder %s24, 0
      %s27 = sadd.s32 %s26, 1
      %s28 = scalar_select %p25, %s26, %s27
      %p31 = pneg %p25
      %p32 = scmp.eq.s32.totalorder %s16, 1
      %p33 = por %p31, %p32
      %p34 = scmp.ne.s32.totalorder %s26, %s29
      %p35 = scmp.eq.s32.totalorder %s16, 0
      %p36 = por %p34, %p35
      %p37 = scmp.ne.s32.totalorder %s26, %s29
      %p38 = scmp.eq.s32.totalorder %s21, 1
      %p39 = por %p37, %p38
      %p40 = scmp.ne.s32.totalorder %s29, %s30
      %p41 = scmp.eq.s32.totalorder %s21, 0
      %p42 = por %p40, %p41
      %p43 = scmp.ne.s32.totalorder %s29, %s30
      %p44 = scmp.eq.s32.totalorder %s22, 1
      %p45 = por %p43, %p44
      %p47 = scmp.ne.s32.totalorder %s30, %s46
      %p48 = scmp.eq.s32.totalorder %s22, 0
      %p49 = por %p47, %p48
      %s51 = sadd.s32 %s50, 1
      %p54 = scmp.eq.s32.totalorder %s16, 1
      %p55 = scmp.ne.s32.totalorder %s50, %s52
      %p56 = scmp.eq.s32.totalorder %s16, 0
      %p57 = por %p55, %p56
      %p58 = scmp.ne.s32.totalorder %s50, %s52
      %p59 = scmp.eq.s32.totalorder %s21, 1
      %p60 = por %p58, %p59
      %p61 = scmp.ne.s32.totalorder %s52, %s53
      %p62 = scmp.eq.s32.totalorder %s21, 0
      %p63 = por %p61, %p62
      %p64 = scmp.ne.s32.totalorder %s52, %s53
      %p65 = scmp.eq.s32.totalorder %s22, 1
      %p66 = por %p64, %p65
      %p68 = scmp.ne.s32.totalorder %s53, %s67
      %p69 = scmp.eq.s32.totalorder %s22, 0
      %p70 = por %p68, %p69
      %s72 = sadd.s32 %s71, 1
      %p75 = scmp.eq.s32.totalorder %s16, 1
      %p76 = scmp.ne.s32.totalorder %s71, %s73
      %p77 = scmp.eq.s32.totalorder %s16, 0
      %p78 = por %p76, %p77
      %p79 = scmp.ne.s32.totalorder %s71, %s73
      %p80 = scmp.eq.s32.totalorder %s21, 1
      %p81 = por %p79, %p80
      %p82 = scmp.ne.s32.totalorder %s73, %s74
      %p83 = scmp.eq.s32.totalorder %s21, 0
      %p84 = por %p82, %p83
      %p85 = scmp.ne.s32.totalorder %s73, %s74
      %p86 = scmp.eq.s32.totalorder %s22, 1
      %p87 = por %p85, %p86
      %p89 = scmp.ne.s32.totalorder %s74, %s88
      %p90 = scmp.eq.s32.totalorder %s22, 0
      %p91 = por %p89, %p90
      %s92 = ssub.s32 %s16, %s23
      %p93 = scmp.eq.s32.totalorder %s92, 0
      %s95 = sadd.s32 %s94, 1
      %s96 = scalar_select %p93, %s94, %s95
      %p99 = pneg %p93
      %p100 = scmp.eq.s32.totalorder %s16, 1
      %p101 = por %p99, %p100
      %p102 = scmp.ne.s32.totalorder %s94, %s97
      %p103 = scmp.eq.s32.totalorder %s16, 0
      %p104 = por %p102, %p103
      %p105 = scmp.ne.s32.totalorder %s94, %s97
      %p106 = scmp.eq.s32.totalorder %s21, 1
      %p107 = por %p105, %p106
      %p108 = scmp.ne.s32.totalorder %s97, %s98
      %p109 = scmp.eq.s32.totalorder %s21, 0
      %p110 = por %p108, %p109
      %p111 = scmp.ne.s32.totalorder %s97, %s98
      %p112 = scmp.eq.s32.totalorder %s22, 1
      %p113 = por %p111, %p112
      %p115 = scmp.ne.s32.totalorder %s98, %s114
      %p116 = scmp.eq.s32.totalorder %s22, 0
      %p117 = por %p115, %p116
      %p118 = scmp.le.s32.totalorder 1, %s16
      %p119 = scmp.lt.s32.totalorder %s16, 3
      %p120 = pnand %p118, %p119
      %p121 = pneg %p120
      // Predicated region
      $region9: #{tpu_custom_call.1} parent=5 // pred_check
        _
      $region10: #{tpu_custom_call.1} parent=5 // pred_check_branch
        %123 = sbr.rel (%p120) target = $region12
      $region11: #{tpu_custom_call.1} parent=5 // pred_region
        %s124 = ssub.s32 %s16, 1
        // Predicated region
        $region13: #{tpu_custom_call.1} parent=11 // pred_check
          %p125 = pneg %p63
        $region14: #{tpu_custom_call.1} parent=11 // pred_check_branch
          %127 = sbr.rel (%p125) target = $region16
        $region15: #{tpu_custom_call.1} parent=11 // pred_region
          %s129 = ssub.s32 4096, 4096
          %130 = vsyncadd [#allocation6], %s129
          %s131 = sshll.u32 [#allocation5], 4
          %s132 = int_to_ptr.vmem [resolvable:$true] %s131
          %137 = dma.hbm_to_vmem [thread:$0]  %s1, 4096, %s132, [#allocation6], 64, 64, 4
        $region16: #{tpu_custom_call.1} parent=11 // pred_fallthru
          _
        // Predicated region
        $region17: #{tpu_custom_call.1} parent=11 // pred_check
          %p138 = pneg %p84
        $region18: #{tpu_custom_call.1} parent=11 // pred_check_branch
          %140 = sbr.rel (%p138) target = $region20
        $region19: #{tpu_custom_call.1} parent=11 // pred_region
          %s142 = ssub.s32 128, 128
          %143 = vsyncadd [#allocation6], %s142
          %s145 = sshll.u32 [#allocation7], 4
          %s146 = int_to_ptr.vmem [resolvable:$true] %s145
          %148 = dma.hbm_to_vmem [thread:$0]  %s2, 128, %s146, [#allocation6]
        $region20: #{tpu_custom_call.1} parent=11 // pred_fallthru
          _
      $region12: #{tpu_custom_call.1} parent=5 // pred_fallthru
        _
      %p149 = scmp.lt.s32.totalorder %s16, 2
      // Predicated region
      $region21: #{tpu_custom_call.1} parent=5 // pred_check
        %p150 = pneg %p149
      $region22: #{tpu_custom_call.1} parent=5 // pred_check_branch
        %152 = sbr.rel (%p150) target = $region24
      $region23: #{tpu_custom_call.1} parent=5 // pred_region
        // Predicated region
        $region25: #{tpu_custom_call.1} parent=23 // pred_check
          %p153 = pneg %p36
        $region26: #{tpu_custom_call.1} parent=23 // pred_check_branch
          %155 = sbr.rel (%p153) target = $region28
        $region27: #{tpu_custom_call.1} parent=23 // pred_region
          %s156 = sand.u32 %s26, 1
          %s157 = scalar_lea.sflag [#allocation3], %s156
          %s158 = sand.u32 %s26, 1
          %s159 = smul.addr %s158, 128
          %s160 = scalar_lea.vmem [#allocation2], %s159
          %s161 = smul.u32 16, %s16
          %s163 = ssub.s32 2048, 2048
          %164 = vsyncadd %s157, %s163
          %s165 = smul.addr %s161, 128
          %s166 = scalar_lea.hbm %s0, %s165
          %s167 = sshll.u32 %s160, 4
          %s168 = int_to_ptr.vmem [resolvable:$true] %s167
          %173 = dma.hbm_to_vmem [thread:$0]  %s166, 2048, %s168, %s157, 128, 128, 8
        $region28: #{tpu_custom_call.1} parent=23 // pred_fallthru
          _
      $region24: #{tpu_custom_call.1} parent=5 // pred_fallthru
        _
      %p174 = scmp.le.s32.totalorder 1, %s16
      %p175 = scmp.lt.s32.totalorder %s16, 3
      %p176 = pnand %p174, %p175
      %p177 = pneg %p176
      // Predicated region
      $region29: #{tpu_custom_call.1} parent=5 // pred_check
        _
      $region30: #{tpu_custom_call.1} parent=5 // pred_check_branch
        %179 = sbr.rel (%p176) target = $region32
      $region31: #{tpu_custom_call.1} parent=5 // pred_region
        %s180 = ssub.s32 %s16, 1
        %s181 = sand.u32 %s29, 1
        %s182 = scalar_lea.sflag [#allocation3], %s181
        %s183 = sand.u32 %s29, 1
        %s184 = smul.addr %s183, 128
        %s185 = scalar_lea.vmem [#allocation2], %s184
        // Predicated region
        $region33: #{tpu_custom_call.1} parent=31 // pred_check
          %p186 = pneg %p42
        $region34: #{tpu_custom_call.1} parent=31 // pred_check_branch
          %188 = sbr.rel (%p186) target = $region36
        $region35: #{tpu_custom_call.1} parent=31 // pred_region
          %189 = dma.done %s182, 2048
        $region36: #{tpu_custom_call.1} parent=31 // pred_fallthru
          _
        // Predicated region
        $region37: #{tpu_custom_call.1} parent=31 // pred_check
          %p190 = pneg %p63
        $region38: #{tpu_custom_call.1} parent=31 // pred_check_branch
          %192 = sbr.rel (%p190) target = $region40
        $region39: #{tpu_custom_call.1} parent=31 // pred_region
          %193 = dma.done [#allocation6], 4096
        $region40: #{tpu_custom_call.1} parent=31 // pred_fallthru
          _
        // Predicated region
        $region41: #{tpu_custom_call.1} parent=31 // pred_check
          %p194 = pneg %p84
        $region42: #{tpu_custom_call.1} parent=31 // pred_check_branch
          %196 = sbr.rel (%p194) target = $region44
        $region43: #{tpu_custom_call.1} parent=31 // pred_region
          %197 = dma.done [#allocation6], 128
        $region44: #{tpu_custom_call.1} parent=31 // pred_fallthru
          _
        %s198 = sand.u32 %s29, 1
        %s199 = scalar_lea.sflag [#allocation3], %s198
        %s200 = sand.u32 %s29, 1
        %s201 = smul.addr %s200, 128
        %s202 = scalar_lea.vmem [#allocation2], %s201
        %p203 = pneg %p42
        %p204 = pneg %p39
        %p205 = pneg %p63
        %p206 = pneg %p60
        %p207 = pneg %p84
        %p208 = pneg %p81
        %p209 = pneg %p110
        %p210 = pneg %p107
        %s211 = sand.u32 %s97, 1
        %s212 = scalar_lea.sflag [#allocation4], %s211
        %s213 = sand.u32 %s97, 1
        %s214 = smul.addr %s213, 128
        %s215 = scalar_lea.vmem [#allocation8], %s214
        %s216 = smul.u32 16, %s21
        %s217 = smul.u32 16, %s21
        %v219 = vld [vmem:[%s185] sm:$0xff]
        %v220 = vld [vmem:[%s185 + $0x8] sm:$0xff]
        %v221 = vld [vmem:[%s185 + $0x10] sm:$0xff]
        %v222 = vld [vmem:[%s185 + $0x18] sm:$0xff]
        %v223 = vld [vmem:[%s185 + $0x20] sm:$0xff]
        %v224 = vld [vmem:[%s185 + $0x28] sm:$0xff]
        %v225 = vld [vmem:[%s185 + $0x30] sm:$0xff]
        %v226 = vld [vmem:[%s185 + $0x38] sm:$0xff]
        %v227 = vld [vmem:[%s185 + $0x40] sm:$0xff]
        %v228 = vld [vmem:[%s185 + $0x48] sm:$0xff]
        %v229 = vld [vmem:[%s185 + $0x50] sm:$0xff]
        %v230 = vld [vmem:[%s185 + $0x58] sm:$0xff]
        %v231 = vld [vmem:[%s185 + $0x60] sm:$0xff]
        %v232 = vld [vmem:[%s185 + $0x68] sm:$0xff]
        %v233 = vld [vmem:[%s185 + $0x70] sm:$0xff]
        %v234 = vld [vmem:[%s185 + $0x78] sm:$0xff]
        %v235 = vpack.c.bf16 %v220, %v219
        %v236 = vpack.c.bf16 %v222, %v221
        %v237 = vpack.c.bf16 %v224, %v223
        %v238 = vpack.c.bf16 %v226, %v225
        %v239 = vpack.c.bf16 %v228, %v227
        %v240 = vpack.c.bf16 %v230, %v229
        %v241 = vpack.c.bf16 %v232, %v231
        %v242 = vpack.c.bf16 %v234, %v233
        %v243 = vld [vmem:[#allocation5] sm:$0xf]
        %v244 = vld [vmem:[#allocation5 + $0x4] sm:$0xf]
        %v245 = vld [vmem:[#allocation5 + $0x8] sm:$0xf]
        %v246 = vld [vmem:[#allocation5 + $0xc] sm:$0xf]
        %v247 = vld [vmem:[#allocation5 + $0x10] sm:$0xf]
        %v248 = vld [vmem:[#allocation5 + $0x14] sm:$0xf]
        %v249 = vld [vmem:[#allocation5 + $0x18] sm:$0xf]
        %v250 = vld [vmem:[#allocation5 + $0x1c] sm:$0xf]
        %v251 = vld [vmem:[#allocation5 + $0x20] sm:$0xf]
        %v252 = vld [vmem:[#allocation5 + $0x24] sm:$0xf]
        %v253 = vld [vmem:[#allocation5 + $0x28] sm:$0xf]
        %v254 = vld [vmem:[#allocation5 + $0x2c] sm:$0xf]
        %v255 = vld [vmem:[#allocation5 + $0x30] sm:$0xf]
        %v256 = vld [vmem:[#allocation5 + $0x34] sm:$0xf]
        %v257 = vld [vmem:[#allocation5 + $0x38] sm:$0xf]
        %v258 = vld [vmem:[#allocation5 + $0x3c] sm:$0xf]
        %v259 = vld [vmem:[#allocation7] sm:$0x1]
        %v260 = vlaneseq
        %v261 = vshrl.u32 %v260, 7
        %v262 = vsub.s32 0, %v261
        %v263 = vrot.slane %v259, %v262
        %v280 = vunpack.c.l.b16 %v243
        %v281 = vunpack.c.l.b16 %v244
        %v282 = vunpack.c.l.b16 %v245
        %v283 = vunpack.c.l.b16 %v246
        %v284 = vunpack.c.l.b16 %v247
        %v285 = vunpack.c.l.b16 %v248
        %v286 = vunpack.c.l.b16 %v249
        %v287 = vunpack.c.l.b16 %v250
        %v288 = vunpack.c.l.b16 %v251
        %v289 = vunpack.c.l.b16 %v252
        %v290 = vunpack.c.l.b16 %v253
        %v291 = vunpack.c.l.b16 %v254
        %v292 = vunpack.c.l.b16 %v255
        %v293 = vunpack.c.l.b16 %v256
        %v294 = vunpack.c.l.b16 %v257
        %v295 = vunpack.c.l.b16 %v258
        %v296 = vpack.c.b16 %v281, %v280
        %v297 = vpack.c.b16 %v283, %v282
        %v298 = vpack.c.b16 %v285, %v284
        %v299 = vpack.c.b16 %v287, %v286
        %v300 = vpack.c.b16 %v289, %v288
        %v301 = vpack.c.b16 %v291, %v290
        %v302 = vpack.c.b16 %v293, %v292
        %v303 = vpack.c.b16 %v295, %v294
        %312 = vmatprep.subr.bf16.mxu0 0
        %313 = vmatpush1.bf16.msra.mxu0 %v303
        %314 = vmatprep.subr.bf16.mxu0 0
        %315 = vmatpush1.bf16.msra.mxu0 %v302
        %316 = vmatprep.subr.bf16.mxu0 0
        %317 = vmatpush1.bf16.msra.mxu0 %v301
        %318 = vmatprep.subr.bf16.mxu0 0
        %319 = vmatpush1.bf16.msra.mxu0 %v300
        %320 = vmatprep.subr.bf16.mxu0 0
        %321 = vmatpush1.bf16.msra.mxu0 %v299
        %322 = vmatprep.subr.bf16.mxu0 0
        %323 = vmatpush1.bf16.msra.mxu0 %v298
        %324 = vmatprep.subr.bf16.mxu0 0
        %325 = vmatpush1.bf16.msra.mxu0 %v297
        %326 = vmatprep.subr.bf16.mxu0 0
        %327 = vmatpush1.bf16.msra.mxu0 %v296
        %328 = vmatprep.subr.bf16.mxu0 0
        %329 = vmatpush2.bf16.msra.mxu0 0
        %330 = vmatprep.subr.bf16.mxu0 0
        %331 = vmatpush2.bf16.msra.mxu0 0
        %332 = vmatprep.subr.bf16.mxu0 0
        %333 = vmatpush2.bf16.msra.mxu0 0
        %334 = vmatprep.subr.bf16.mxu0 0
        %335 = vmatpush2.bf16.msra.mxu0 0
        %336 = vmatprep.subr.bf16.mxu0 0
        %337 = vmatpush2.bf16.msra.mxu0 0
        %338 = vmatprep.subr.bf16.mxu0 0
        %339 = vmatpush2.bf16.msra.mxu0 0
        %340 = vmatprep.subr.bf16.mxu0 0
        %341 = vmatpush2.bf16.msra.mxu0 0
        %342 = vmatprep.subr.bf16.mxu0 0
        %343 = vmatpush2.bf16.msra.mxu0 0
        %344 = vmatprep.mubr.bf16.mxu0 0
        %345 = vmatmul.mubr.bf16.gmra.mxu0 %v235
        %v346 = vpop.f32.mrf.mxu0
        %v347 = vadd.f32 %v263, %v346
        %v348 = vpop.f32.mrf.mxu0
        %v349 = vpop.f32.mrf.mxu0
        %v350 = vadd.f32 %v263, %v349
        %v351 = vpop.f32.mrf.mxu0
        %352 = vmatprep.mubr.bf16.mxu0 0
        %353 = vmatmul.mubr.bf16.gmra.mxu0 %v236
        %v354 = vpop.f32.mrf.mxu0
        %v355 = vadd.f32 %v263, %v354
        %v356 = vpop.f32.mrf.mxu0
        %v357 = vpop.f32.mrf.mxu0
        %v358 = vadd.f32 %v263, %v357
        %v359 = vpop.f32.mrf.mxu0
        %360 = vmatprep.mubr.bf16.mxu0 0
        %361 = vmatmul.mubr.bf16.gmra.mxu0 %v237
        %v362 = vpop.f32.mrf.mxu0
        %v363 = vadd.f32 %v263, %v362
        %v364 = vpop.f32.mrf.mxu0
        %v365 = vpop.f32.mrf.mxu0
        %v366 = vadd.f32 %v263, %v365
        %v367 = vpop.f32.mrf.mxu0
        %368 = vmatprep.mubr.bf16.mxu0 0
        %369 = vmatmul.mubr.bf16.gmra.mxu0 %v238
        %v370 = vpop.f32.mrf.mxu0
        %v371 = vadd.f32 %v263, %v370
        %v372 = vpop.f32.mrf.mxu0
        %v373 = vpop.f32.mrf.mxu0
        %v374 = vadd.f32 %v263, %v373
        %v375 = vpop.f32.mrf.mxu0
        %376 = vmatprep.mubr.bf16.mxu0 0
        %377 = vmatmul.mubr.bf16.gmra.mxu0 %v239
        %v378 = vpop.f32.mrf.mxu0
        %v379 = vadd.f32 %v263, %v378
        %v380 = vpop.f32.mrf.mxu0
        %v381 = vpop.f32.mrf.mxu0
        %v382 = vadd.f32 %v263, %v381
        %v383 = vpop.f32.mrf.mxu0
        %384 = vmatprep.mubr.bf16.mxu0 0
        %385 = vmatmul.mubr.bf16.gmra.mxu0 %v240
        %v386 = vpop.f32.mrf.mxu0
        %v387 = vadd.f32 %v263, %v386
        %v388 = vpop.f32.mrf.mxu0
        %v389 = vpop.f32.mrf.mxu0
        %v390 = vadd.f32 %v263, %v389
        %v391 = vpop.f32.mrf.mxu0
        %392 = vmatprep.mubr.bf16.mxu0 0
        %393 = vmatmul.mubr.bf16.gmra.mxu0 %v241
        %v394 = vpop.f32.mrf.mxu0
        %v395 = vadd.f32 %v263, %v394
        %v396 = vpop.f32.mrf.mxu0
        %v397 = vpop.f32.mrf.mxu0
        %v398 = vadd.f32 %v263, %v397
        %v399 = vpop.f32.mrf.mxu0
        %400 = vmatprep.mubr.bf16.mxu0 0
        %401 = vmatmul.mubr.bf16.gmra.mxu0 %v242
        %v402 = vpop.f32.mrf.mxu0
        %v403 = vadd.f32 %v263, %v402
        %v404 = vpop.f32.mrf.mxu0
        %v405 = vpop.f32.mrf.mxu0
        %v406 = vadd.f32 %v263, %v405
        %v407 = vpop.f32.mrf.mxu0
        %408 = vdwg.mxu0
        %v409 = vmax.f32 %v347, 0.0
        %v410 = vmax.f32 %v350, 0.0
        %v411 = vmax.f32 %v355, 0.0
        %v412 = vmax.f32 %v358, 0.0
        %v413 = vmax.f32 %v363, 0.0
        %v414 = vmax.f32 %v366, 0.0
        %v415 = vmax.f32 %v371, 0.0
        %v416 = vmax.f32 %v374, 0.0
        %v417 = vmax.f32 %v379, 0.0
        %v418 = vmax.f32 %v382, 0.0
        %v419 = vmax.f32 %v387, 0.0
        %v420 = vmax.f32 %v390, 0.0
        %v421 = vmax.f32 %v395, 0.0
        %v422 = vmax.f32 %v398, 0.0
        %v423 = vmax.f32 %v403, 0.0
        %v424 = vmax.f32 %v406, 0.0
        %v425 = vpack.c.bf16 %v410, %v409
        %v426 = vpack.c.bf16 %v412, %v411
        %v427 = vpack.c.bf16 %v414, %v413
        %v428 = vpack.c.bf16 %v416, %v415
        %v429 = vpack.c.bf16 %v418, %v417
        %v430 = vpack.c.bf16 %v420, %v419
        %v431 = vpack.c.bf16 %v422, %v421
        %v432 = vpack.c.bf16 %v424, %v423
        %s433 = scalar_lea.vmem [#allocation5], 64
        %v434 = vld [vmem:[%s433] sm:$0xf]
        %v435 = vld [vmem:[%s433 + $0x4] sm:$0xf]
        %v436 = vld [vmem:[%s433 + $0x8] sm:$0xf]
        %v437 = vld [vmem:[%s433 + $0xc] sm:$0xf]
        %v438 = vld [vmem:[%s433 + $0x10] sm:$0xf]
        %v439 = vld [vmem:[%s433 + $0x14] sm:$0xf]
        %v440 = vld [vmem:[%s433 + $0x18] sm:$0xf]
        %v441 = vld [vmem:[%s433 + $0x1c] sm:$0xf]
        %v442 = vld [vmem:[%s433 + $0x20] sm:$0xf]
        %v443 = vld [vmem:[%s433 + $0x24] sm:$0xf]
        %v444 = vld [vmem:[%s433 + $0x28] sm:$0xf]
        %v445 = vld [vmem:[%s433 + $0x2c] sm:$0xf]
        %v446 = vld [vmem:[%s433 + $0x30] sm:$0xf]
        %v447 = vld [vmem:[%s433 + $0x34] sm:$0xf]
        %v448 = vld [vmem:[%s433 + $0x38] sm:$0xf]
        %v449 = vld [vmem:[%s433 + $0x3c] sm:$0xf]
        %v450 = vld [vmem:[#allocation7 + $0x1] sm:$0x1]
        %v451 = vlaneseq
        %v452 = vshrl.u32 %v451, 7
        %v453 = vsub.s32 0, %v452
        %v454 = vrot.slane %v450, %v453
        %v471 = vunpack.c.l.b16 %v434
        %v472 = vunpack.c.l.b16 %v435
        %v473 = vunpack.c.l.b16 %v436
        %v474 = vunpack.c.l.b16 %v437
        %v475 = vunpack.c.l.b16 %v438
        %v476 = vunpack.c.l.b16 %v439
        %v477 = vunpack.c.l.b16 %v440
        %v478 = vunpack.c.l.b16 %v441
        %v479 = vunpack.c.l.b16 %v442
        %v480 = vunpack.c.l.b16 %v443
        %v481 = vunpack.c.l.b16 %v444
        %v482 = vunpack.c.l.b16 %v445
        %v483 = vunpack.c.l.b16 %v446
        %v484 = vunpack.c.l.b16 %v447
        %v485 = vunpack.c.l.b16 %v448
        %v486 = vunpack.c.l.b16 %v449
        %v487 = vpack.c.b16 %v472, %v471
        %v488 = vpack.c.b16 %v474, %v473
        %v489 = vpack.c.b16 %v476, %v475
        %v490 = vpack.c.b16 %v478, %v477
        %v491 = vpack.c.b16 %v480, %v479
        %v492 = vpack.c.b16 %v482, %v481
        %v493 = vpack.c.b16 %v484, %v483
        %v494 = vpack.c.b16 %v486, %v485
        %503 = vmatprep.subr.bf16.mxu0 0
        %504 = vmatpush1.bf16.msra.mxu0 %v494
        %505 = vmatprep.subr.bf16.mxu0 0
        %506 = vmatpush1.bf16.msra.mxu0 %v493
        %507 = vmatprep.subr.bf16.mxu0 0
        %508 = vmatpush1.bf16.msra.mxu0 %v492
        %509 = vmatprep.subr.bf16.mxu0 0
        %510 = vmatpush1.bf16.msra.mxu0 %v491
        %511 = vmatprep.subr.bf16.mxu0 0
        %512 = vmatpush1.bf16.msra.mxu0 %v490
        %513 = vmatprep.subr.bf16.mxu0 0
        %514 = vmatpush1.bf16.msra.mxu0 %v489
        %515 = vmatprep.subr.bf16.mxu0 0
        %516 = vmatpush1.bf16.msra.mxu0 %v488
        %517 = vmatprep.subr.bf16.mxu0 0
        %518 = vmatpush1.bf16.msra.mxu0 %v487
        %519 = vmatprep.subr.bf16.mxu0 0
        %520 = vmatpush2.bf16.msra.mxu0 0
        %521 = vmatprep.subr.bf16.mxu0 0
        %522 = vmatpush2.bf16.msra.mxu0 0
        %523 = vmatprep.subr.bf16.mxu0 0
        %524 = vmatpush2.bf16.msra.mxu0 0
        %525 = vmatprep.subr.bf16.mxu0 0
        %526 = vmatpush2.bf16.msra.mxu0 0
        %527 = vmatprep.subr.bf16.mxu0 0
        %528 = vmatpush2.bf16.msra.mxu0 0
        %529 = vmatprep.subr.bf16.mxu0 0
        %530 = vmatpush2.bf16.msra.mxu0 0
        %531 = vmatprep.subr.bf16.mxu0 0
        %532 = vmatpush2.bf16.msra.mxu0 0
        %533 = vmatprep.subr.bf16.mxu0 0
        %534 = vmatpush2.bf16.msra.mxu0 0
        %535 = vmatprep.mubr.bf16.mxu0 0
        %536 = vmatmul.mubr.bf16.gmra.mxu0 %v425
        %v537 = vpop.f32.mrf.mxu0
        %v538 = vadd.f32 %v454, %v537
        %v539 = vpop.f32.mrf.mxu0
        %v540 = vpop.f32.mrf.mxu0
        %v541 = vadd.f32 %v454, %v540
        %v542 = vpop.f32.mrf.mxu0
        %543 = vmatprep.mubr.bf16.mxu0 0
        %544 = vmatmul.mubr.bf16.gmra.mxu0 %v426
        %v545 = vpop.f32.mrf.mxu0
        %v546 = vadd.f32 %v454, %v545
        %v547 = vpop.f32.mrf.mxu0
        %v548 = vpop.f32.mrf.mxu0
        %v549 = vadd.f32 %v454, %v548
        %v550 = vpop.f32.mrf.mxu0
        %551 = vmatprep.mubr.bf16.mxu0 0
        %552 = vmatmul.mubr.bf16.gmra.mxu0 %v427
        %v553 = vpop.f32.mrf.mxu0
        %v554 = vadd.f32 %v454, %v553
        %v555 = vpop.f32.mrf.mxu0
        %v556 = vpop.f32.mrf.mxu0
        %v557 = vadd.f32 %v454, %v556
        %v558 = vpop.f32.mrf.mxu0
        %559 = vmatprep.mubr.bf16.mxu0 0
        %560 = vmatmul.mubr.bf16.gmra.mxu0 %v428
        %v561 = vpop.f32.mrf.mxu0
        %v562 = vadd.f32 %v454, %v561
        %v563 = vpop.f32.mrf.mxu0
        %v564 = vpop.f32.mrf.mxu0
        %v565 = vadd.f32 %v454, %v564
        %v566 = vpop.f32.mrf.mxu0
        %567 = vmatprep.mubr.bf16.mxu0 0
        %568 = vmatmul.mubr.bf16.gmra.mxu0 %v429
        %v569 = vpop.f32.mrf.mxu0
        %v570 = vadd.f32 %v454, %v569
        %v571 = vpop.f32.mrf.mxu0
        %v572 = vpop.f32.mrf.mxu0
        %v573 = vadd.f32 %v454, %v572
        %v574 = vpop.f32.mrf.mxu0
        %575 = vmatprep.mubr.bf16.mxu0 0
        %576 = vmatmul.mubr.bf16.gmra.mxu0 %v430
        %v577 = vpop.f32.mrf.mxu0
        %v578 = vadd.f32 %v454, %v577
        %v579 = vpop.f32.mrf.mxu0
        %v580 = vpop.f32.mrf.mxu0
        %v581 = vadd.f32 %v454, %v580
        %v582 = vpop.f32.mrf.mxu0
        %583 = vmatprep.mubr.bf16.mxu0 0
        %584 = vmatmul.mubr.bf16.gmra.mxu0 %v431
        %v585 = vpop.f32.mrf.mxu0
        %v586 = vadd.f32 %v454, %v585
        %v587 = vpop.f32.mrf.mxu0
        %v588 = vpop.f32.mrf.mxu0
        %v589 = vadd.f32 %v454, %v588
        %v590 = vpop.f32.mrf.mxu0
        %591 = vmatprep.mubr.bf16.mxu0 0
        %592 = vmatmul.mubr.bf16.gmra.mxu0 %v432
        %v593 = vpop.f32.mrf.mxu0
        %v594 = vadd.f32 %v454, %v593
        %v595 = vpop.f32.mrf.mxu0
        %v596 = vpop.f32.mrf.mxu0
        %v597 = vadd.f32 %v454, %v596
        %v598 = vpop.f32.mrf.mxu0
        %599 = vdwg.mxu0
        %v600 = vmax.f32 %v538, 0.0
        %v601 = vmax.f32 %v541, 0.0
        %v602 = vmax.f32 %v546, 0.0
        %v603 = vmax.f32 %v549, 0.0
        %v604 = vmax.f32 %v554, 0.0
        %v605 = vmax.f32 %v557, 0.0
        %v606 = vmax.f32 %v562, 0.0
        %v607 = vmax.f32 %v565, 0.0
        %v608 = vmax.f32 %v570, 0.0
        %v609 = vmax.f32 %v573, 0.0
        %v610 = vmax.f32 %v578, 0.0
        %v611 = vmax.f32 %v581, 0.0
        %v612 = vmax.f32 %v586, 0.0
        %v613 = vmax.f32 %v589, 0.0
        %v614 = vmax.f32 %v594, 0.0
        %v615 = vmax.f32 %v597, 0.0
        %v616 = vpack.c.bf16 %v601, %v600
        %v617 = vpack.c.bf16 %v603, %v602
        %v618 = vpack.c.bf16 %v605, %v604
        %v619 = vpack.c.bf16 %v607, %v606
        %v620 = vpack.c.bf16 %v609, %v608
        %v621 = vpack.c.bf16 %v611, %v610
        %v622 = vpack.c.bf16 %v613, %v612
        %v623 = vpack.c.bf16 %v615, %v614
        %s624 = scalar_lea.vmem [#allocation5], 128
        %v625 = vld [vmem:[%s624] sm:$0xf]
        %v626 = vld [vmem:[%s624 + $0x4] sm:$0xf]
        %v627 = vld [vmem:[%s624 + $0x8] sm:$0xf]
        %v628 = vld [vmem:[%s624 + $0xc] sm:$0xf]
        %v629 = vld [vmem:[%s624 + $0x10] sm:$0xf]
        %v630 = vld [vmem:[%s624 + $0x14] sm:$0xf]
        %v631 = vld [vmem:[%s624 + $0x18] sm:$0xf]
        %v632 = vld [vmem:[%s624 + $0x1c] sm:$0xf]
        %v633 = vld [vmem:[%s624 + $0x20] sm:$0xf]
        %v634 = vld [vmem:[%s624 + $0x24] sm:$0xf]
        %v635 = vld [vmem:[%s624 + $0x28] sm:$0xf]
        %v636 = vld [vmem:[%s624 + $0x2c] sm:$0xf]
        %v637 = vld [vmem:[%s624 + $0x30] sm:$0xf]
        %v638 = vld [vmem:[%s624 + $0x34] sm:$0xf]
        %v639 = vld [vmem:[%s624 + $0x38] sm:$0xf]
        %v640 = vld [vmem:[%s624 + $0x3c] sm:$0xf]
        %v641 = vld [vmem:[#allocation7 + $0x2] sm:$0x1]
        %v642 = vlaneseq
        %v643 = vshrl.u32 %v642, 7
        %v644 = vsub.s32 0, %v643
        %v645 = vrot.slane %v641, %v644
        %v662 = vunpack.c.l.b16 %v625
        %v663 = vunpack.c.l.b16 %v626
        %v664 = vunpack.c.l.b16 %v627
        %v665 = vunpack.c.l.b16 %v628
        %v666 = vunpack.c.l.b16 %v629
        %v667 = vunpack.c.l.b16 %v630
        %v668 = vunpack.c.l.b16 %v631
        %v669 = vunpack.c.l.b16 %v632
        %v670 = vunpack.c.l.b16 %v633
        %v671 = vunpack.c.l.b16 %v634
        %v672 = vunpack.c.l.b16 %v635
        %v673 = vunpack.c.l.b16 %v636
        %v674 = vunpack.c.l.b16 %v637
        %v675 = vunpack.c.l.b16 %v638
        %v676 = vunpack.c.l.b16 %v639
        %v677 = vunpack.c.l.b16 %v640
        %v678 = vpack.c.b16 %v663, %v662
        %v679 = vpack.c.b16 %v665, %v664
        %v680 = vpack.c.b16 %v667, %v666
        %v681 = vpack.c.b16 %v669, %v668
        %v682 = vpack.c.b16 %v671, %v670
        %v683 = vpack.c.b16 %v673, %v672
        %v684 = vpack.c.b16 %v675, %v674
        %v685 = vpack.c.b16 %v677, %v676
        %694 = vmatprep.subr.bf16.mxu0 0
        %695 = vmatpush1.bf16.msra.mxu0 %v685
        %696 = vmatprep.subr.bf16.mxu0 0
        %697 = vmatpush1.bf16.msra.mxu0 %v684
        %698 = vmatprep.subr.bf16.mxu0 0
        %699 = vmatpush1.bf16.msra.mxu0 %v683
        %700 = vmatprep.subr.bf16.mxu0 0
        %701 = vmatpush1.bf16.msra.mxu0 %v682
        %702 = vmatprep.subr.bf16.mxu0 0
        %703 = vmatpush1.bf16.msra.mxu0 %v681
        %704 = vmatprep.subr.bf16.mxu0 0
        %705 = vmatpush1.bf16.msra.mxu0 %v680
        %706 = vmatprep.subr.bf16.mxu0 0
        %707 = vmatpush1.bf16.msra.mxu0 %v679
        %708 = vmatprep.subr.bf16.mxu0 0
        %709 = vmatpush1.bf16.msra.mxu0 %v678
        %710 = vmatprep.subr.bf16.mxu0 0
        %711 = vmatpush2.bf16.msra.mxu0 0
        %712 = vmatprep.subr.bf16.mxu0 0
        %713 = vmatpush2.bf16.msra.mxu0 0
        %714 = vmatprep.subr.bf16.mxu0 0
        %715 = vmatpush2.bf16.msra.mxu0 0
        %716 = vmatprep.subr.bf16.mxu0 0
        %717 = vmatpush2.bf16.msra.mxu0 0
        %718 = vmatprep.subr.bf16.mxu0 0
        %719 = vmatpush2.bf16.msra.mxu0 0
        %720 = vmatprep.subr.bf16.mxu0 0
        %721 = vmatpush2.bf16.msra.mxu0 0
        %722 = vmatprep.subr.bf16.mxu0 0
        %723 = vmatpush2.bf16.msra.mxu0 0
        %724 = vmatprep.subr.bf16.mxu0 0
        %725 = vmatpush2.bf16.msra.mxu0 0
        %726 = vmatprep.mubr.bf16.mxu0 0
        %727 = vmatmul.mubr.bf16.gmra.mxu0 %v616
        %v728 = vpop.f32.mrf.mxu0
        %v729 = vadd.f32 %v645, %v728
        %v730 = vpop.f32.mrf.mxu0
        %v731 = vpop.f32.mrf.mxu0
        %v732 = vadd.f32 %v645, %v731
        %v733 = vpop.f32.mrf.mxu0
        %734 = vmatprep.mubr.bf16.mxu0 0
        %735 = vmatmul.mubr.bf16.gmra.mxu0 %v617
        %v736 = vpop.f32.mrf.mxu0
        %v737 = vadd.f32 %v645, %v736
        %v738 = vpop.f32.mrf.mxu0
        %v739 = vpop.f32.mrf.mxu0
        %v740 = vadd.f32 %v645, %v739
        %v741 = vpop.f32.mrf.mxu0
        %742 = vmatprep.mubr.bf16.mxu0 0
        %743 = vmatmul.mubr.bf16.gmra.mxu0 %v618
        %v744 = vpop.f32.mrf.mxu0
        %v745 = vadd.f32 %v645, %v744
        %v746 = vpop.f32.mrf.mxu0
        %v747 = vpop.f32.mrf.mxu0
        %v748 = vadd.f32 %v645, %v747
        %v749 = vpop.f32.mrf.mxu0
        %750 = vmatprep.mubr.bf16.mxu0 0
        %751 = vmatmul.mubr.bf16.gmra.mxu0 %v619
        %v752 = vpop.f32.mrf.mxu0
        %v753 = vadd.f32 %v645, %v752
        %v754 = vpop.f32.mrf.mxu0
        %v755 = vpop.f32.mrf.mxu0
        %v756 = vadd.f32 %v645, %v755
        %v757 = vpop.f32.mrf.mxu0
        %758 = vmatprep.mubr.bf16.mxu0 0
        %759 = vmatmul.mubr.bf16.gmra.mxu0 %v620
        %v760 = vpop.f32.mrf.mxu0
        %v761 = vadd.f32 %v645, %v760
        %v762 = vpop.f32.mrf.mxu0
        %v763 = vpop.f32.mrf.mxu0
        %v764 = vadd.f32 %v645, %v763
        %v765 = vpop.f32.mrf.mxu0
        %766 = vmatprep.mubr.bf16.mxu0 0
        %767 = vmatmul.mubr.bf16.gmra.mxu0 %v621
        %v768 = vpop.f32.mrf.mxu0
        %v769 = vadd.f32 %v645, %v768
        %v770 = vpop.f32.mrf.mxu0
        %v771 = vpop.f32.mrf.mxu0
        %v772 = vadd.f32 %v645, %v771
        %v773 = vpop.f32.mrf.mxu0
        %774 = vmatprep.mubr.bf16.mxu0 0
        %775 = vmatmul.mubr.bf16.gmra.mxu0 %v622
        %v776 = vpop.f32.mrf.mxu0
        %v777 = vadd.f32 %v645, %v776
        %v778 = vpop.f32.mrf.mxu0
        %v779 = vpop.f32.mrf.mxu0
        %v780 = vadd.f32 %v645, %v779
        %v781 = vpop.f32.mrf.mxu0
        %782 = vmatprep.mubr.bf16.mxu0 0
        %783 = vmatmul.mubr.bf16.gmra.mxu0 %v623
        %v784 = vpop.f32.mrf.mxu0
        %v785 = vadd.f32 %v645, %v784
        %v786 = vpop.f32.mrf.mxu0
        %v787 = vpop.f32.mrf.mxu0
        %v788 = vadd.f32 %v645, %v787
        %v789 = vpop.f32.mrf.mxu0
        %790 = vdwg.mxu0
        %v791 = vmax.f32 %v729, 0.0
        %v792 = vmax.f32 %v732, 0.0
        %v793 = vmax.f32 %v737, 0.0
        %v794 = vmax.f32 %v740, 0.0
        %v795 = vmax.f32 %v745, 0.0
        %v796 = vmax.f32 %v748, 0.0
        %v797 = vmax.f32 %v753, 0.0
        %v798 = vmax.f32 %v756, 0.0
        %v799 = vmax.f32 %v761, 0.0
        %v800 = vmax.f32 %v764, 0.0
        %v801 = vmax.f32 %v769, 0.0
        %v802 = vmax.f32 %v772, 0.0
        %v803 = vmax.f32 %v777, 0.0
        %v804 = vmax.f32 %v780, 0.0
        %v805 = vmax.f32 %v785, 0.0
        %v806 = vmax.f32 %v788, 0.0
        %v807 = vpack.c.bf16 %v792, %v791
        %v808 = vpack.c.bf16 %v794, %v793
        %v809 = vpack.c.bf16 %v796, %v795
        %v810 = vpack.c.bf16 %v798, %v797
        %v811 = vpack.c.bf16 %v800, %v799
        %v812 = vpack.c.bf16 %v802, %v801
        %v813 = vpack.c.bf16 %v804, %v803
        %v814 = vpack.c.bf16 %v806, %v805
        %s815 = scalar_lea.vmem [#allocation5], 192
        %v816 = vld [vmem:[%s815] sm:$0xf]
        %v817 = vld [vmem:[%s815 + $0x4] sm:$0xf]
        %v818 = vld [vmem:[%s815 + $0x8] sm:$0xf]
        %v819 = vld [vmem:[%s815 + $0xc] sm:$0xf]
        %v820 = vld [vmem:[%s815 + $0x10] sm:$0xf]
        %v821 = vld [vmem:[%s815 + $0x14] sm:$0xf]
        %v822 = vld [vmem:[%s815 + $0x18] sm:$0xf]
        %v823 = vld [vmem:[%s815 + $0x1c] sm:$0xf]
        %v824 = vld [vmem:[%s815 + $0x20] sm:$0xf]
        %v825 = vld [vmem:[%s815 + $0x24] sm:$0xf]
        %v826 = vld [vmem:[%s815 + $0x28] sm:$0xf]
        %v827 = vld [vmem:[%s815 + $0x2c] sm:$0xf]
        %v828 = vld [vmem:[%s815 + $0x30] sm:$0xf]
        %v829 = vld [vmem:[%s815 + $0x34] sm:$0xf]
        %v830 = vld [vmem:[%s815 + $0x38] sm:$0xf]
        %v831 = vld [vmem:[%s815 + $0x3c] sm:$0xf]
        %v832 = vld [vmem:[#allocation7 + $0x3] sm:$0x1]
        %v833 = vlaneseq
        %v834 = vshrl.u32 %v833, 7
        %v835 = vsub.s32 0, %v834
        %v836 = vrot.slane %v832, %v835
        %v853 = vunpack.c.l.b16 %v816
        %v854 = vunpack.c.l.b16 %v817
        %v855 = vunpack.c.l.b16 %v818
        %v856 = vunpack.c.l.b16 %v819
        %v857 = vunpack.c.l.b16 %v820
        %v858 = vunpack.c.l.b16 %v821
        %v859 = vunpack.c.l.b16 %v822
        %v860 = vunpack.c.l.b16 %v823
        %v861 = vunpack.c.l.b16 %v824
        %v862 = vunpack.c.l.b16 %v825
        %v863 = vunpack.c.l.b16 %v826
        %v864 = vunpack.c.l.b16 %v827
        %v865 = vunpack.c.l.b16 %v828
        %v866 = vunpack.c.l.b16 %v829
        %v867 = vunpack.c.l.b16 %v830
        %v868 = vunpack.c.l.b16 %v831
        %v869 = vpack.c.b16 %v854, %v853
        %v870 = vpack.c.b16 %v856, %v855
        %v871 = vpack.c.b16 %v858, %v857
        %v872 = vpack.c.b16 %v860, %v859
        %v873 = vpack.c.b16 %v862, %v861
        %v874 = vpack.c.b16 %v864, %v863
        %v875 = vpack.c.b16 %v866, %v865
        %v876 = vpack.c.b16 %v868, %v867
        %885 = vmatprep.subr.bf16.mxu0 0
        %886 = vmatpush1.bf16.msra.mxu0 %v876
        %887 = vmatprep.subr.bf16.mxu0 0
        %888 = vmatpush1.bf16.msra.mxu0 %v875
        %889 = vmatprep.subr.bf16.mxu0 0
        %890 = vmatpush1.bf16.msra.mxu0 %v874
        %891 = vmatprep.subr.bf16.mxu0 0
        %892 = vmatpush1.bf16.msra.mxu0 %v873
        %893 = vmatprep.subr.bf16.mxu0 0
        %894 = vmatpush1.bf16.msra.mxu0 %v872
        %895 = vmatprep.subr.bf16.mxu0 0
        %896 = vmatpush1.bf16.msra.mxu0 %v871
        %897 = vmatprep.subr.bf16.mxu0 0
        %898 = vmatpush1.bf16.msra.mxu0 %v870
        %899 = vmatprep.subr.bf16.mxu0 0
        %900 = vmatpush1.bf16.msra.mxu0 %v869
        %901 = vmatprep.subr.bf16.mxu0 0
        %902 = vmatpush2.bf16.msra.mxu0 0
        %903 = vmatprep.subr.bf16.mxu0 0
        %904 = vmatpush2.bf16.msra.mxu0 0
        %905 = vmatprep.subr.bf16.mxu0 0
        %906 = vmatpush2.bf16.msra.mxu0 0
        %907 = vmatprep.subr.bf16.mxu0 0
        %908 = vmatpush2.bf16.msra.mxu0 0
        %909 = vmatprep.subr.bf16.mxu0 0
        %910 = vmatpush2.bf16.msra.mxu0 0
        %911 = vmatprep.subr.bf16.mxu0 0
        %912 = vmatpush2.bf16.msra.mxu0 0
        %913 = vmatprep.subr.bf16.mxu0 0
        %914 = vmatpush2.bf16.msra.mxu0 0
        %915 = vmatprep.subr.bf16.mxu0 0
        %916 = vmatpush2.bf16.msra.mxu0 0
        %917 = vmatprep.mubr.bf16.mxu0 0
        %918 = vmatmul.mubr.bf16.gmra.mxu0 %v807
        %v919 = vpop.f32.mrf.mxu0
        %v920 = vadd.f32 %v836, %v919
        %v921 = vpop.f32.mrf.mxu0
        %v922 = vpop.f32.mrf.mxu0
        %v923 = vadd.f32 %v836, %v922
        %v924 = vpop.f32.mrf.mxu0
        %925 = vmatprep.mubr.bf16.mxu0 0
        %926 = vmatmul.mubr.bf16.gmra.mxu0 %v808
        %v927 = vpop.f32.mrf.mxu0
        %v928 = vadd.f32 %v836, %v927
        %v929 = vpop.f32.mrf.mxu0
        %v930 = vpop.f32.mrf.mxu0
        %v931 = vadd.f32 %v836, %v930
        %v932 = vpop.f32.mrf.mxu0
        %933 = vmatprep.mubr.bf16.mxu0 0
        %934 = vmatmul.mubr.bf16.gmra.mxu0 %v809
        %v935 = vpop.f32.mrf.mxu0
        %v936 = vadd.f32 %v836, %v935
        %v937 = vpop.f32.mrf.mxu0
        %v938 = vpop.f32.mrf.mxu0
        %v939 = vadd.f32 %v836, %v938
        %v940 = vpop.f32.mrf.mxu0
        %941 = vmatprep.mubr.bf16.mxu0 0
        %942 = vmatmul.mubr.bf16.gmra.mxu0 %v810
        %v943 = vpop.f32.mrf.mxu0
        %v944 = vadd.f32 %v836, %v943
        %v945 = vpop.f32.mrf.mxu0
        %v946 = vpop.f32.mrf.mxu0
        %v947 = vadd.f32 %v836, %v946
        %v948 = vpop.f32.mrf.mxu0
        %949 = vmatprep.mubr.bf16.mxu0 0
        %950 = vmatmul.mubr.bf16.gmra.mxu0 %v811
        %v951 = vpop.f32.mrf.mxu0
        %v952 = vadd.f32 %v836, %v951
        %v953 = vpop.f32.mrf.mxu0
        %v954 = vpop.f32.mrf.mxu0
        %v955 = vadd.f32 %v836, %v954
        %v956 = vpop.f32.mrf.mxu0
        %957 = vmatprep.mubr.bf16.mxu0 0
        %958 = vmatmul.mubr.bf16.gmra.mxu0 %v812
        %v959 = vpop.f32.mrf.mxu0
        %v960 = vadd.f32 %v836, %v959
        %v961 = vpop.f32.mrf.mxu0
        %v962 = vpop.f32.mrf.mxu0
        %v963 = vadd.f32 %v836, %v962
        %v964 = vpop.f32.mrf.mxu0
        %965 = vmatprep.mubr.bf16.mxu0 0
        %966 = vmatmul.mubr.bf16.gmra.mxu0 %v813
        %v967 = vpop.f32.mrf.mxu0
        %v968 = vadd.f32 %v836, %v967
        %v969 = vpop.f32.mrf.mxu0
        %v970 = vpop.f32.mrf.mxu0
        %v971 = vadd.f32 %v836, %v970
        %v972 = vpop.f32.mrf.mxu0
        %973 = vmatprep.mubr.bf16.mxu0 0
        %974 = vmatmul.mubr.bf16.gmra.mxu0 %v814
        %v975 = vpop.f32.mrf.mxu0
        %v976 = vadd.f32 %v836, %v975
        %v977 = vpop.f32.mrf.mxu0
        %v978 = vpop.f32.mrf.mxu0
        %v979 = vadd.f32 %v836, %v978
        %v980 = vpop.f32.mrf.mxu0
        %981 = vdwg.mxu0
        %982 = vmax.xlane.f32.xlu0 %v920
        %v983 = vpop.xlane.xlu0 %982
        %984 = vmax.xlane.f32.xlu0 %v923
        %v985 = vpop.xlane.xlu0 %984
        %986 = vmax.xlane.f32.xlu0 %v928
        %v987 = vpop.xlane.xlu0 %986
        %988 = vmax.xlane.f32.xlu0 %v931
        %v989 = vpop.xlane.xlu0 %988
        %990 = vmax.xlane.f32.xlu0 %v936
        %v991 = vpop.xlane.xlu0 %990
        %992 = vmax.xlane.f32.xlu0 %v939
        %v993 = vpop.xlane.xlu0 %992
        %994 = vmax.xlane.f32.xlu0 %v944
        %v995 = vpop.xlane.xlu0 %994
        %996 = vmax.xlane.f32.xlu0 %v947
        %v997 = vpop.xlane.xlu0 %996
        %998 = vmax.xlane.f32.xlu0 %v952
        %v999 = vpop.xlane.xlu0 %998
        %1000 = vmax.xlane.f32.xlu0 %v955
        %v1001 = vpop.xlane.xlu0 %1000
        %1002 = vmax.xlane.f32.xlu0 %v960
        %v1003 = vpop.xlane.xlu0 %1002
        %1004 = vmax.xlane.f32.xlu0 %v963
        %v1005 = vpop.xlane.xlu0 %1004
        %1006 = vmax.xlane.f32.xlu0 %v968
        %v1007 = vpop.xlane.xlu0 %1006
        %1008 = vmax.xlane.f32.xlu0 %v971
        %v1009 = vpop.xlane.xlu0 %1008
        %1010 = vmax.xlane.f32.xlu0 %v976
        %v1011 = vpop.xlane.xlu0 %1010
        %1012 = vmax.xlane.f32.xlu0 %v979
        %v1013 = vpop.xlane.xlu0 %1012
        %v1014 = vsub.f32 %v920, %v983
        %v1015 = vsub.f32 %v923, %v985
        %v1016 = vsub.f32 %v928, %v987
        %v1017 = vsub.f32 %v931, %v989
        %v1018 = vsub.f32 %v936, %v991
        %v1019 = vsub.f32 %v939, %v993
        %v1020 = vsub.f32 %v944, %v995
        %v1021 = vsub.f32 %v947, %v997
        %v1022 = vsub.f32 %v952, %v999
        %v1023 = vsub.f32 %v955, %v1001
        %v1024 = vsub.f32 %v960, %v1003
        %v1025 = vsub.f32 %v963, %v1005
        %v1026 = vsub.f32 %v968, %v1007
        %v1027 = vsub.f32 %v971, %v1009
        %v1028 = vsub.f32 %v976, %v1011
        %v1029 = vsub.f32 %v979, %v1013
        %v1030 = vmul.f32 %v1014, 1.442695
        %v1031 = vpow.pop %v1030
        %v1032 = vmul.f32 %v1015, 1.442695
        %v1033 = vpow.pop %v1032
        %v1034 = vmul.f32 %v1016, 1.442695
        %v1035 = vpow.pop %v1034
        %v1036 = vmul.f32 %v1017, 1.442695
        %v1037 = vpow.pop %v1036
        %v1038 = vmul.f32 %v1018, 1.442695
        %v1039 = vpow.pop %v1038
        %v1040 = vmul.f32 %v1019, 1.442695
        %v1041 = vpow.pop %v1040
        %v1042 = vmul.f32 %v1020, 1.442695
        %v1043 = vpow.pop %v1042
        %v1044 = vmul.f32 %v1021, 1.442695
        %v1045 = vpow.pop %v1044
        %v1046 = vmul.f32 %v1022, 1.442695
        %v1047 = vpow.pop %v1046
        %v1048 = vmul.f32 %v1023, 1.442695
        %v1049 = vpow.pop %v1048
        %v1050 = vmul.f32 %v1024, 1.442695
        %v1051 = vpow.pop %v1050
        %v1052 = vmul.f32 %v1025, 1.442695
        %v1053 = vpow.pop %v1052
        %v1054 = vmul.f32 %v1026, 1.442695
        %v1055 = vpow.pop %v1054
        %v1056 = vmul.f32 %v1027, 1.442695
        %v1057 = vpow.pop %v1056
        %v1058 = vmul.f32 %v1028, 1.442695
        %v1059 = vpow.pop %v1058
        %v1060 = vmul.f32 %v1029, 1.442695
        %v1061 = vpow.pop %v1060
        %1062 = vadd.xlane.f32.xlu0 %v1031
        %v1063 = vpop.xlane.xlu0 %1062
        %1064 = vadd.xlane.f32.xlu0 %v1033
        %v1065 = vpop.xlane.xlu0 %1064
        %1066 = vadd.xlane.f32.xlu0 %v1035
        %v1067 = vpop.xlane.xlu0 %1066
        %1068 = vadd.xlane.f32.xlu0 %v1037
        %v1069 = vpop.xlane.xlu0 %1068
        %1070 = vadd.xlane.f32.xlu0 %v1039
        %v1071 = vpop.xlane.xlu0 %1070
        %1072 = vadd.xlane.f32.xlu0 %v1041
        %v1073 = vpop.xlane.xlu0 %1072
        %1074 = vadd.xlane.f32.xlu0 %v1043
        %v1075 = vpop.xlane.xlu0 %1074
        %1076 = vadd.xlane.f32.xlu0 %v1045
        %v1077 = vpop.xlane.xlu0 %1076
        %1078 = vadd.xlane.f32.xlu0 %v1047
        %v1079 = vpop.xlane.xlu0 %1078
        %1080 = vadd.xlane.f32.xlu0 %v1049
        %v1081 = vpop.xlane.xlu0 %1080
        %1082 = vadd.xlane.f32.xlu0 %v1051
        %v1083 = vpop.xlane.xlu0 %1082
        %1084 = vadd.xlane.f32.xlu0 %v1053
        %v1085 = vpop.xlane.xlu0 %1084
        %1086 = vadd.xlane.f32.xlu0 %v1055
        %v1087 = vpop.xlane.xlu0 %1086
        %1088 = vadd.xlane.f32.xlu0 %v1057
        %v1089 = vpop.xlane.xlu0 %1088
        %1090 = vadd.xlane.f32.xlu0 %v1059
        %v1091 = vpop.xlane.xlu0 %1090
        %1092 = vadd.xlane.f32.xlu0 %v1061
        %v1093 = vpop.xlane.xlu0 %1092
        %v1094 = vrcp.pop %v1063
        %v1095 = vmul.f32 %v1031, %v1094
        %v1096 = vrcp.pop %v1065
        %v1097 = vmul.f32 %v1033, %v1096
        %v1098 = vrcp.pop %v1067
        %v1099 = vmul.f32 %v1035, %v1098
        %v1100 = vrcp.pop %v1069
        %v1101 = vmul.f32 %v1037, %v1100
        %v1102 = vrcp.pop %v1071
        %v1103 = vmul.f32 %v1039, %v1102
        %v1104 = vrcp.pop %v1073
        %v1105 = vmul.f32 %v1041, %v1104
        %v1106 = vrcp.pop %v1075
        %v1107 = vmul.f32 %v1043, %v1106
        %v1108 = vrcp.pop %v1077
        %v1109 = vmul.f32 %v1045, %v1108
        %v1110 = vrcp.pop %v1079
        %v1111 = vmul.f32 %v1047, %v1110
        %v1112 = vrcp.pop %v1081
        %v1113 = vmul.f32 %v1049, %v1112
        %v1114 = vrcp.pop %v1083
        %v1115 = vmul.f32 %v1051, %v1114
        %v1116 = vrcp.pop %v1085
        %v1117 = vmul.f32 %v1053, %v1116
        %v1118 = vrcp.pop %v1087
        %v1119 = vmul.f32 %v1055, %v1118
        %v1120 = vrcp.pop %v1089
        %v1121 = vmul.f32 %v1057, %v1120
        %v1122 = vrcp.pop %v1091
        %v1123 = vmul.f32 %v1059, %v1122
        %v1124 = vrcp.pop %v1093
        %v1125 = vmul.f32 %v1061, %v1124
        %1126 = vst [vmem:[%s215] sm:$0xff] %v1095
        %1127 = vst [vmem:[%s215 + $0x8] sm:$0xff] %v1097
        %1128 = vst [vmem:[%s215 + $0x10] sm:$0xff] %v1099
        %1129 = vst [vmem:[%s215 + $0x18] sm:$0xff] %v1101
        %1130 = vst [vmem:[%s215 + $0x20] sm:$0xff] %v1103
        %1131 = vst [vmem:[%s215 + $0x28] sm:$0xff] %v1105
        %1132 = vst [vmem:[%s215 + $0x30] sm:$0xff] %v1107
        %1133 = vst [vmem:[%s215 + $0x38] sm:$0xff] %v1109
        %1134 = vst [vmem:[%s215 + $0x40] sm:$0xff] %v1111
        %1135 = vst [vmem:[%s215 + $0x48] sm:$0xff] %v1113
        %1136 = vst [vmem:[%s215 + $0x50] sm:$0xff] %v1115
        %1137 = vst [vmem:[%s215 + $0x58] sm:$0xff] %v1117
        %1138 = vst [vmem:[%s215 + $0x60] sm:$0xff] %v1119
        %1139 = vst [vmem:[%s215 + $0x68] sm:$0xff] %v1121
        %1140 = vst [vmem:[%s215 + $0x70] sm:$0xff] %v1123
        %1141 = vst [vmem:[%s215 + $0x78] sm:$0xff] %v1125
        %s1142 = sand.u32 %s97, 1
        %s1143 = scalar_lea.sflag [#allocation4], %s1142
        %s1144 = sand.u32 %s97, 1
        %s1145 = smul.addr %s1144, 128
        %s1146 = scalar_lea.vmem [#allocation8], %s1145
        // Predicated region
        $region45: #{tpu_custom_call.1} parent=31 // pred_check
          %p1147 = pneg %p107
        $region46: #{tpu_custom_call.1} parent=31 // pred_check_branch
          %1149 = sbr.rel (%p1147) target = $region48
        $region47: #{tpu_custom_call.1} parent=31 // pred_region
          %s1150 = smul.u32 16, %s21
          %s1152 = ssub.s32 2048, 2048
          %1153 = vsyncadd %s1143, %s1152
          %s1154 = smul.addr %s1150, 128
          %s1155 = scalar_lea.hbm %s3, %s1154
          %s1156 = sshll.u32 %s1146, 4
          %s1157 = int_to_ptr.vmem [resolvable:$true] %s1156
          %1162 = dma.vmem_to_hbm [thread:$0]  %s1157, 2048, %s1155, %s1143, 128, 128, 8
        $region48: #{tpu_custom_call.1} parent=31 // pred_fallthru
          _
      $region32: #{tpu_custom_call.1} parent=5 // pred_fallthru
        _
      %p1163 = scmp.le.s32.totalorder 2, %s16
      // Predicated region
      $region49: #{tpu_custom_call.1} parent=5 // pred_check
        %p1164 = pneg %p1163
      $region50: #{tpu_custom_call.1} parent=5 // pred_check_branch
        %1166 = sbr.rel (%p1164) target = $region52
      $region51: #{tpu_custom_call.1} parent=5 // pred_region
        %s1167 = ssub.s32 %s16, 2
        // Predicated region
        $region53: #{tpu_custom_call.1} parent=51 // pred_check
          %p1168 = pneg %p113
        $region54: #{tpu_custom_call.1} parent=51 // pred_check_branch
          %1170 = sbr.rel (%p1168) target = $region56
        $region55: #{tpu_custom_call.1} parent=51 // pred_region
          %s1171 = sand.u32 %s98, 1
          %s1172 = scalar_lea.sflag [#allocation4], %s1171
          %s1173 = sand.u32 %s98, 1
          %s1174 = smul.addr %s1173, 128
          %s1175 = scalar_lea.vmem [#allocation8], %s1174
          %1176 = dma.done %s1172, 2048
        $region56: #{tpu_custom_call.1} parent=51 // pred_fallthru
          _
      $region52: #{tpu_custom_call.1} parent=5 // pred_fallthru
        _
    $region6: #{tpu_custom_call.1} parent=1 // loop_footer
      %s20 = sadd.s32 1, %s16
    $region7: #{tpu_custom_call.1} parent=1 // loop_footer_branch
      %15 = sbr.rel target = $region3
    $region8: #{tpu_custom_call.1} parent=1 // loop_exit
      _
    %1177 = vsyncpa [#allocation3], 1
    %s1178 = scalar_lea.sflag [#allocation3], 1
    %1179 = vsyncpa %s1178, 1
    %1180 = vsyncpa [#allocation6], 1
    %1181 = vsyncpa [#allocation4], 1
    %s1182 = scalar_lea.sflag [#allocation4], 1
    %1183 = vsyncpa %s1182, 1

</llo_original>
